<compile_context>
chip_gen: v7x
topology: tpu7x:2x2x1
jax: 0.10.0
libtpu: 0.0.40
codegen_flags: <defaults>
</compile_context>

<pallas_src>
import functools
import math

import jax
import jax.numpy as jnp
from jax import lax
from jax.experimental import pallas as pl
from jax.experimental.pallas import tpu as pltpu


def _cdiv(a, b):
    return -(-a // b)


def _rms_kernel(x_ref, ss_ref, o_ref, *, clamp, unnorm):
    # x_ref : (tm, L)  input dtype (f32 / bf16 / ...)
    # ss_ref: (2, L)   f32   row 0 = scale, row 1 = shift
    # o_ref : (tm, L)  output dtype
    x = x_ref[...].astype(jnp.float32)
    scale = ss_ref[0:1, :]          # (1, L) broadcasts over sublanes
    shift = ss_ref[1:2, :]
    if unnorm:
        if clamp:
            x = jnp.clip(x, -clamp, clamp)
        y = x * scale + shift
    else:
        y = x * scale + shift
        if clamp:
            y = jnp.clip(y, -clamp, clamp)
    o_ref[...] = y.astype(o_ref.dtype)


def _vmem_capacity_bytes():
    try:
        info = pltpu.get_tpu_info()
        v = int(getattr(info, "vmem_capacity_bytes", 0))
        if v > 0:
            # TODO(synk): if this reports per-chip (not per-TensorCore) VMEM on v7x the
            # math below still stays safe: tiles are budgeted at vmem//5 and the scoped
            # limit at min(vmem//2, 64 MiB), so double-buffered traffic fits 64 MiB/TC.
            return min(v, 128 << 20)
    except Exception:
        pass
    return 64 << 20          # conservative (v7x per-TC VMEM)


def _tile_budget_bytes(vmem):
    # in+out traffic per grid step (double-buffered => ~2x this resident).
    return max(2 << 20, min(vmem // 5, 28 << 20))


@functools.lru_cache(maxsize=None)
def _build_call(rows_v, lane, tm, in_dtype, out_dtype, clamp, unnorm, vmem_limit):
    """Build (once per configuration) a jitted pallas_call."""
    in_dt = jnp.dtype(in_dtype)
    out_dt = jnp.dtype(out_dtype)
    n = rows_v * lane
    kernel = functools.partial(_rms_kernel, clamp=clamp, unnorm=unnorm)
    call = pl.pallas_call(
        kernel,
        out_shape=jax.ShapeDtypeStruct((rows_v, lane), out_dt),
        grid_spec=pltpu.PrefetchScalarGridSpec(
            num_scalar_prefetch=0,
            grid=(_cdiv(rows_v, tm),),
            in_specs=[
                pl.BlockSpec((tm, lane), lambda i: (i, 0)),
                pl.BlockSpec((2, lane), lambda i: (0, 0)),
            ],
            out_specs=pl.BlockSpec((tm, lane), lambda i: (i, 0)),
        ),
        compiler_params=pltpu.CompilerParams(
            dimension_semantics=("parallel",),
            vmem_limit_bytes=int(vmem_limit),
        ),
        cost_estimate=pl.CostEstimate(
            flops=3 * n,
            transcendentals=0,
            bytes_accessed=n * in_dt.itemsize + n * out_dt.itemsize + 2 * lane * 4,
        ),
    )
    return jax.jit(call)


class RunningMeanStd:
    """JAX/Pallas port of the PyTorch RunningMeanStd forward pass."""

    def __init__(self, dim: int, clamp: float = 0.0):
        self.epsilon = 1e-5
        self.clamp = float(clamp)       # clamp == 0.0 disables clipping (as in PyTorch)
        self.frozen = False
        self.dim = dim
        self.mean = jnp.zeros((dim,), dtype=jnp.float32)
        self.var = jnp.ones((dim,), dtype=jnp.float32)
        self.count = jnp.ones((), dtype=jnp.float32)
        self._ss_cache = {}

    # ---- O(dim) scalar prep, cached until the running stats change -----------
    def _scale_shift(self, unnorm, reps):
        key = (bool(unnorm), int(reps))
        ss = self._ss_cache.get(key)
        if ss is None:
            mean = self.mean.astype(jnp.float32)
            var = self.var.astype(jnp.float32) + self.epsilon
            if unnorm:
                scale = jnp.sqrt(var)
                shift = mean
            else:
                inv = lax.rsqrt(var)
                scale = inv
                shift = -mean * inv
            if reps > 1:
                scale = jnp.tile(scale, reps)
                shift = jnp.tile(shift, reps)
            ss = jnp.stack([scale, shift], axis=0)          # (2, reps*dim) f32
            self._ss_cache[key] = ss
        return ss

    # ---- one pallas_call over a (rows_v, lane) view ---------------------------
    def _launch(self, x2d, ss, unnorm, out_dtype):
        rows_v, lane = x2d.shape
        in_bytes = jnp.dtype(x2d.dtype).itemsize
        out_bytes = jnp.dtype(out_dtype).itemsize
        per_row = lane * (in_bytes + out_bytes)

        vmem = _vmem_capacity_bytes()
        target = _tile_budget_bytes(vmem)
        vmem_limit = min(vmem // 2, 64 << 20)

        if rows_v <= 8:
            tm = rows_v                                     # full-array block
        else:
            k_fit = rows_v // 8                             # tm = 8*k must fit rows_v
            k_budget = max(1, target // (8 * per_row))
            k = max(1, min(k_budget, k_fit))
            g8 = _cdiv(rows_v, 8)
            if rows_v * per_row > (4 << 20):
                # >= ~4 grid steps: >=3 so double-buffering hides compute/writeback,
                # an even count so v7x's two TensorCores get equal work.
                k = max(1, min(k, g8 // 4))
            steps = _cdiv(g8, k)
            if steps > 1 and steps % 2:
                k_alt = max(1, _cdiv(g8, steps + 1))
                if k_alt <= k_fit and _cdiv(g8, k_alt) % 2 == 0:
                    k = k_alt
            tm = 8 * k

        call = _build_call(rows_v, lane, tm,
                           jnp.dtype(x2d.dtype).name, jnp.dtype(out_dtype).name,
                           self.clamp, bool(unnorm), vmem_limit)
        return call(x2d, ss)

    # ---- forward --------------------------------------------------------------
    def __call__(self, x, unnorm: bool = False, out_dtype=None):
        orig_shape = x.shape
        dim = orig_shape[-1]
        assert dim == self.dim
        # Default: output dtype follows the input dtype (bf16 -> bf16, less HBM
        # traffic). Pass out_dtype=jnp.float32 for strict PyTorch promotion parity.
        out_dtype = jnp.dtype(x.dtype) if out_dtype is None else jnp.dtype(out_dtype)
        rows = int(math.prod(orig_shape[:-1]))
        n = rows * dim
        if n == 0:
            return jnp.zeros(orig_shape, out_dtype)

        in_bytes = jnp.dtype(x.dtype).itemsize
        out_bytes = out_dtype.itemsize

        # Lane-dense view: fold `reps` rows so the minor dim is a multiple of 128
        # (unmasked vst). Cap the lcm expansion so 8 rows always fit the tile
        # budget (odd / very large dims fall back to the natural layout).
        reps = 128 // math.gcd(dim, 128)
        lane = dim * reps
        target = _tile_budget_bytes(_vmem_capacity_bytes())
        if reps > 1 and 8 * lane * (in_bytes + out_bytes) > target:
            reps, lane = 1, dim
        bulk_rows_v = rows // reps
        rem_rows = rows - bulk_rows_v * reps

        if rem_rows == 0:
            x_bulk = x.reshape(bulk_rows_v, lane)           # pure reshape, no copy
            out = self._launch(x_bulk, self._scale_shift(unnorm, reps),
                               unnorm, out_dtype)
            return out.reshape(orig_shape)

        if bulk_rows_v == 0:
            # Fewer rows than `reps`: natural layout, single tiny call.
            out = self._launch(x.reshape(rows, dim), self._scale_shift(unnorm, 1),
                               unnorm, out_dtype)
            return out.reshape(orig_shape)

        # Ragged row count: keep the lane-dense kernel for the bulk and run the
        # <= reps-1 leftover rows through a tiny second call at natural width.
        # TODO(synk): the prefix/suffix slices + concat copy the data once; still
        # cheaper than masked vst.msk stores over the whole array for narrow dims.
        x_flat = x.reshape(-1)
        split = bulk_rows_v * lane
        out_bulk = self._launch(x_flat[:split].reshape(bulk_rows_v, lane),
                                self._scale_shift(unnorm, reps), unnorm, out_dtype)
        out_rem = self._launch(x_flat[split:].reshape(rem_rows, dim),
                               self._scale_shift(unnorm, 1), unnorm, out_dtype)
        out = jnp.concatenate([out_bulk.reshape(-1), out_rem.reshape(-1)])
        return out.reshape(orig_shape)

    # ---- running-statistics update (plain JAX glue, not the hot path) ---------
    def update(self, x):
        if self.frozen:
            return
        x2 = x.reshape(-1, x.shape[-1]).astype(jnp.float32)
        count = x2.shape[0]
        mean = jnp.mean(x2, axis=0)
        var = jnp.var(x2, axis=0, ddof=1)                   # correction=1, as in torch
        count_ = count + self.count
        delta = mean - self.mean
        m = (self.var * self.count + var * count
             + delta ** 2 * self.count * count / count_)
        self.mean = self.mean + delta * count / count_
        self.var = m / count_
        self.count = count_
        self._ss_cache = {}                                 # stats changed

    def freeze(self):
        self.frozen = True


if __name__ == "__main__":
    key = jax.random.PRNGKey(0)
    batch, seq, dim = 2, 4, 32
    x = jax.random.normal(key, (batch, seq, dim), dtype=jnp.float32)

    rms = RunningMeanStd(dim, clamp=5.0)
    rms.update(3.0 * x + 1.5)           # non-trivial deterministic stats

    def ref(mod, xv, unnorm=False):
        mean = mod.mean.astype(jnp.float32)
        var = mod.var.astype(jnp.float32) + mod.epsilon
        xv = xv.astype(jnp.float32)
        if unnorm:
            if mod.clamp:
                xv = jnp.clip(xv, -mod.clamp, mod.clamp)
            return mean + jnp.sqrt(var) * xv
        y = (xv - mean) * lax.rsqrt(var)
        return jnp.clip(y, -mod.clamp, mod.clamp) if mod.clamp else y

    # 1) Small aligned shape: norm + unnorm paths.
    y = jax.block_until_ready(rms(x))
    z = jax.block_until_ready(rms(x, unnorm=True))
    assert y.dtype == jnp.float32
    assert jnp.allclose(y, ref(rms, x), atol=1e-5, rtol=1e-5)
    assert jnp.allclose(z, ref(rms, x, unnorm=True), atol=1e-5, rtol=1e-5)

    # 2) Larger batch: lane-dense multi-row tiles.
    x_big = jax.random.normal(jax.random.PRNGKey(1), (16, 128, dim), dtype=jnp.float32)
    y_big = jax.block_until_ready(rms(x_big))
    assert jnp.allclose(y_big, ref(rms, x_big), atol=1e-5, rtol=1e-5)

    # 3) Ragged row count (rows % reps != 0): lane-dense bulk + tiny remainder call.
    x_rag = jax.random.normal(jax.random.PRNGKey(2), (3, 5, dim), dtype=jnp.float32)
    y_rag = jax.block_until_ready(rms(x_rag))
    assert jnp.allclose(y_rag, ref(rms, x_rag), atol=1e-5, rtol=1e-5)

    # 4) bf16 input: bf16 output by default (less HBM write traffic) ...
    x_bf = x_big.astype(jnp.bfloat16)
    y_bf = jax.block_until_ready(rms(x_bf))
    assert y_bf.dtype == jnp.bfloat16
    assert jnp.allclose(y_bf.astype(jnp.float32), ref(rms, x_bf), atol=2e-2, rtol=2e-2)
    # ... and f32 output opt-in for strict PyTorch promotion parity.
    y_bf32 = jax.block_until_ready(rms(x_bf, out_dtype=jnp.float32))
    assert y_bf32.dtype == jnp.float32
    assert jnp.allclose(y_bf32, ref(rms, x_bf), atol=1e-4, rtol=1e-4)

    # 5) Odd feature dim exercises the capped-lcm / natural-layout path.
    rms33 = RunningMeanStd(33, clamp=0.0)
    x33 = jax.random.normal(jax.random.PRNGKey(3), (batch, seq, 33), dtype=jnp.float32)
    rms33.update(x33 * 2.0 - 0.3)
    y33 = jax.block_until_ready(rms33(x33))
    assert jnp.allclose(y33, ref(rms33, x33), atol=1e-5, rtol=1e-5)

    print("KERNEL_OK")
</pallas_src>

<mosaic_0001>
module attributes {stable_mosaic.version = 11 : i64} {
  func.func @_rms_kernel(%arg0: i32, %arg1: memref<2x128xf32, #tpu.memory_space<vmem>>, %arg2: memref<2x128xf32, #tpu.memory_space<vmem>>, %arg3: memref<2x128xf32, #tpu.memory_space<vmem>>) attributes {dimension_semantics = [#tpu.dimension_semantics<parallel>], iteration_bounds = array<i64: 1>, scalar_prefetch = 0 : i64, scratch_operands = 0 : i64, tpu.core_type = #tpu.core_type<tc>, window_params = [{transform_indices = @transform_0, window_bounds = array<i64: 2, 128>}, {pipeline_mode = #tpu.pipeline_mode<synchronous>, transform_indices = @transform_1, window_bounds = array<i64: 2, 128>}, {transform_indices = @transform_2, window_bounds = array<i64: 2, 128>}]} {
    %c0 = arith.constant 0 : index
    %c0_0 = arith.constant 0 : index
    %0 = vector.load %arg1[%c0, %c0_0] : memref<2x128xf32, #tpu.memory_space<vmem>>, vector<2x128xf32>
    %c0_1 = arith.constant 0 : index
    %c0_2 = arith.constant 0 : index
    %1 = vector.load %arg2[%c0_1, %c0_2] : memref<2x128xf32, #tpu.memory_space<vmem>>, vector<1x128xf32>
    %c1 = arith.constant 1 : index
    %c0_3 = arith.constant 0 : index
    %2 = vector.load %arg2[%c1, %c0_3] : memref<2x128xf32, #tpu.memory_space<vmem>>, vector<1x128xf32>
    %3 = vector.broadcast %1 : vector<1x128xf32> to vector<2x128xf32>
    %4 = arith.mulf %0, %3 : vector<2x128xf32>
    %5 = vector.broadcast %2 : vector<1x128xf32> to vector<2x128xf32>
    %6 = arith.addf %4, %5 : vector<2x128xf32>
    %cst = arith.constant -5.000000e+00 : f32
    %cst_4 = arith.constant 5.000000e+00 : f32
    %7 = vector.broadcast %cst : f32 to vector<2x128xf32>
    %8 = arith.maximumf %7, %6 : vector<2x128xf32>
    %9 = vector.broadcast %cst_4 : f32 to vector<2x128xf32>
    %10 = arith.minimumf %9, %8 : vector<2x128xf32>
    %c0_5 = arith.constant 0 : index
    %c0_6 = arith.constant 0 : index
    %11 = vector.load %arg3[%c0_5, %c0_6] : memref<2x128xf32, #tpu.memory_space<vmem>>, vector<2x128xf32>
    tpu.vector_store %arg3[%c0_5, %c0_6], %10 {strides = array<i32>} : memref<2x128xf32, #tpu.memory_space<vmem>>, vector<2x128xf32>,
    return
  }
  func.func @transform_0(%arg0: i32) -> (i32, i32) {
    %c0_i32 = arith.constant 0 : i32
    %c0_i32_0 = arith.constant 0 : i32
    return %arg0, %c0_i32 : i32, i32
  }
  func.func @transform_1(%arg0: i32) -> (i32, i32) {
    %c0_i32 = arith.constant 0 : i32
    %c0_i32_0 = arith.constant 0 : i32
    %c0_i32_1 = arith.constant 0 : i32
    return %c0_i32, %c0_i32_0 : i32, i32
  }
  func.func @transform_2(%arg0: i32) -> (i32, i32) {
    %c0_i32 = arith.constant 0 : i32
    %c0_i32_0 = arith.constant 0 : i32
    return %arg0, %c0_i32 : i32, i32
  }
}

</mosaic_0001>

<llo_original>
// kernel: tpu_custom_call.1
$region0: #{tpu_custom_call.1}
  #allocation0 [shape = 'u32[]', space=smem, size = 0x4, offset = 0x4, fixed_abs, tag = 'smem constant byte address 0x4 - core index']
  #allocation1 [shape = 'u32[144,128]{1,0:T(1,128)}', space=vmem, size = 0x12000, scoped, tag = 'internal scratch']
  %s0 = inlined_call_operand.hbm [shape: f32[2,128], index: 0, kind: input, shape index: {}]
  %s1 = inlined_call_operand.vmem [shape: f32[2,128], index: 1, kind: input, shape index: {}]
  %s2 = inlined_call_operand.hbm [shape: f32[2,128], index: 2, kind: output, shape index: {}]
  %s3 = sld [smem:[#allocation0]]
  $region22: #{tpu_custom_call.1} parent=0
    _
  %s5 = ssub.s32 1, %s3
  %s6 = scalar_select 0, %s5, %s3
  $region1: #{tpu_custom_call.1} parent=0
    #allocation2 [shape = 'u8[1024]{0}', space=vmem, size = 0x400, scoped, tag = 'input window, operand 0, single buffered']
    #allocation3 [shape = 's32[1]{0}', space=sflag, size = 0x4, scoped, tag = 'scoped memory for tpu_custom_call.1']
    #allocation4 [shape = 's32[1]{0}', space=sflag, size = 0x4, scoped, tag = 'scoped memory for tpu_custom_call.1']
    #allocation5 [shape = 'u8[1024]{0}', space=vmem, size = 0x400, scoped, tag = 'output window, operand 0, single buffered']
    %7 = vsyncpa [#allocation3], 0
    %8 = vsyncpa [#allocation4], 0
    // Predicated region
    $region2: #{tpu_custom_call.1} parent=1 // pred_check
      _
    $region3: #{tpu_custom_call.1} parent=1 // pred_check_branch
      %10 = sbr.rel (0) target = $region5
    $region4: #{tpu_custom_call.1} parent=1 // pred_region
      %s12 = ssub.s32 32, 32
      %13 = vsyncadd [#allocation3], %s12
      %s15 = sshll.u32 [#allocation2], 4
      %s16 = int_to_ptr.vmem [resolvable:$true] %s15
      %18 = dma.hbm_to_vmem [thread:$0]  %s0, 32, %s16, [#allocation3]
    $region5: #{tpu_custom_call.1} parent=1 // pred_fallthru
      _
    // Predicated region
    $region6: #{tpu_custom_call.1} parent=1 // pred_check
      _
    $region7: #{tpu_custom_call.1} parent=1 // pred_check_branch
      %20 = sbr.rel (0) target = $region9
    $region8: #{tpu_custom_call.1} parent=1 // pred_region
      _
    $region9: #{tpu_custom_call.1} parent=1 // pred_fallthru
      _
    // Predicated region
    $region10: #{tpu_custom_call.1} parent=1 // pred_check
      _
    $region11: #{tpu_custom_call.1} parent=1 // pred_check_branch
      %22 = sbr.rel (0) target = $region13
    $region12: #{tpu_custom_call.1} parent=1 // pred_region
      %23 = dma.done [#allocation3], 32
    $region13: #{tpu_custom_call.1} parent=1 // pred_fallthru
      _
    %v24 = vld [vmem:[#allocation2] sm:$0x3]
    %v25 = vld [vmem:[%s1] sm:$0x1]
    %v26 = vld [vmem:[%s1 + $0x1] sm:$0x1]
    %v27 = vlaneseq
    %v28 = vshrl.u32 %v27, 7
    %v29 = vsub.s32 0, %v28
    %v30 = vrot.slane %v25, %v29
    %v31 = vmul.f32 %v24, %v30
    %v32 = vlaneseq
    %v33 = vshrl.u32 %v32, 7
    %v34 = vsub.s32 0, %v33
    %v35 = vrot.slane %v26, %v34
    %v36 = vadd.f32 %v31, %v35
    %v37 = vmax.f32 %v36, -5.0
    %v38 = vmin.f32 %v37, 5.0
    %39 = vst [vmem:[#allocation5] sm:$0x3] %v38
    // Predicated region
    $region14: #{tpu_custom_call.1} parent=1 // pred_check
      _
    $region15: #{tpu_custom_call.1} parent=1 // pred_check_branch
      %41 = sbr.rel (0) target = $region17
    $region16: #{tpu_custom_call.1} parent=1 // pred_region
      %s43 = ssub.s32 32, 32
      %44 = vsyncadd [#allocation4], %s43
      %s46 = sshll.u32 [#allocation5], 4
      %s47 = int_to_ptr.vmem [resolvable:$true] %s46
      %49 = dma.vmem_to_hbm [thread:$0]  %s47, 32, %s2, [#allocation4]
    $region17: #{tpu_custom_call.1} parent=1 // pred_fallthru
      _
    // Predicated region
    $region18: #{tpu_custom_call.1} parent=1 // pred_check
      _
    $region19: #{tpu_custom_call.1} parent=1 // pred_check_branch
      %51 = sbr.rel (0) target = $region21
    $region20: #{tpu_custom_call.1} parent=1 // pred_region
      %52 = dma.done [#allocation4], 32
    $region21: #{tpu_custom_call.1} parent=1 // pred_fallthru
      _
    %53 = vsyncpa [#allocation3], 1
    %54 = vsyncpa [#allocation4], 1

</llo_original>
